<compile_context>
chip_gen: v7x
topology: tpu7x:2x2x1
jax: 0.10.0
libtpu: 0.0.40
codegen_flags: <defaults>
</compile_context>

<pallas_src>
import itertools
import numpy as np
import jax
import jax.numpy as jnp
from jax.experimental import pallas as pl
from jax.experimental.pallas import tpu as pltpu

MATCHER_COEFF = {"class": 1.0, "bbox": 5.0, "giou": 2.0}
GIOU_EPS = 1e-10
USE_FOCAL_LOSS = False  # TODO(synk): focal-loss cost variant (use_focal_loss=True) not implemented.


def _round_up(x, m):
    return ((x + m - 1) // m) * m


def _make_cost_kernel(ng, cache_onehot):
    """Kernel over one (batch, query-tile) grid point.

    Layout (transposed / lane-dense): queries on lanes, GT + classes on sublanes.
      logits_ref : [1, Cp, TQ]   boxes_ref : [1, 4, TQ]
      ids_ref    : [1, Gp, 1]    tbox_ref  : [1, Gp, 4]
      c_ref      : [1, Gp, TQ]   onehot_ref: [Gp, Cp] bf16 scratch
    Row `ng` of the one-hot is all-ones -> the MXU gather also produces the softmax
    denominator (no cross-lane reduction needed).
    """

    def kernel(logits_ref, boxes_ref, ids_ref, tbox_ref, c_ref, onehot_ref):
        def build_onehot():
            gp, cp = onehot_ref.shape
            ids = ids_ref[0]                                            # [Gp, 1] int32
            cls_iota = jax.lax.broadcasted_iota(jnp.int32, (gp, cp), 1)
            row_iota = jax.lax.broadcasted_iota(jnp.int32, (gp, cp), 0)
            # exact 0/1 one-hot, plus an all-ones row at index ng (softmax denominator)
            onehot_ref[...] = ((cls_iota == ids) | (row_iota == ng)).astype(jnp.bfloat16)

        if cache_onehot:
            # one-hot depends only on batch b -> rebuild once per batch (q axis "arbitrary")
            pl.when(pl.program_id(1) == 0)(build_onehot)
        else:
            build_onehot()

        # ---------- class cost: softmax gather via bf16 MXU matmul ----------
        lg = logits_ref[0].astype(jnp.float32)                          # [Cp, TQ]
        m = jnp.max(lg, axis=0, keepdims=True)                          # [1, TQ] (sublane reduce)
        e = jnp.exp(lg - m)                                             # f32 (v5e-safe)
        g = jnp.dot(onehot_ref[...], e.astype(jnp.bfloat16),
                    preferred_element_type=jnp.float32)                 # [Gp, TQ]
        # row ng == sum_c e -> denominator. Clamp: padded query lanes have e == 0 everywhere.
        inv_sum = pl.reciprocal(jnp.maximum(g[ng:ng + 1, :], 1e-30), approx=True)  # [1, TQ]
        c = MATCHER_COEFF["class"] * (-(g * inv_sum))                   # cost_class = -softmax prob

        # ---------- L1 bbox cost in cxcywh space (implicit [Gp,1] x [1,TQ] broadcast) ----------
        ob = boxes_ref[0].astype(jnp.float32)                           # [4, TQ]
        tb = tbox_ref[0].astype(jnp.float32)                            # [Gp, 4]
        ocx, ocy, ow, oh = ob[0:1, :], ob[1:2, :], ob[2:3, :], ob[3:4, :]       # [1, TQ]
        tcx, tcy, tw, th = tb[:, 0:1], tb[:, 1:2], tb[:, 2:3], tb[:, 3:4]       # [Gp, 1]
        c = c + MATCHER_COEFF["bbox"] * (jnp.abs(tcx - ocx) + jnp.abs(tcy - ocy)
                                         + jnp.abs(tw - ow) + jnp.abs(th - oh))

        # ---------- GIoU cost: cost_giou = giou_loss - 1 = -miou ----------
        # x-axis terms first (and released), then y-axis terms; no broadcast_to.
        hw, hhw = 0.5 * ow, 0.5 * oh
        hwg, hhg = 0.5 * tw, 0.5 * th
        x1, x2 = ocx - hw, ocx + hw                                     # [1, TQ]
        x1g, x2g = tcx - hwg, tcx + hwg                                 # [Gp, 1]
        w_i = jnp.maximum(jnp.minimum(x2, x2g) - jnp.maximum(x1, x1g), 0.0)   # [Gp, TQ]
        w_c = jnp.maximum(x2, x2g) - jnp.minimum(x1, x1g)                     # [Gp, TQ]
        y1, y2 = ocy - hhw, ocy + hhw
        y1g, y2g = tcy - hhg, tcy + hhg
        h_i = jnp.maximum(jnp.minimum(y2, y2g) - jnp.maximum(y1, y1g), 0.0)
        h_c = jnp.maximum(y2, y2g) - jnp.minimum(y1, y1g)

        overlap = w_i * h_i                                             # [Gp, TQ]
        union = ow * oh + tw * th - overlap + GIOU_EPS
        area_c = w_c * h_c + GIOU_EPS
        # miou = overlap/union - (area_c - union)/area_c, with one approx EUP reciprocal
        inv = pl.reciprocal(union * area_c, approx=True)
        miou = (overlap * area_c - (area_c - union) * union) * inv
        c_ref[0] = c + MATCHER_COEFF["giou"] * (-miou)

    return kernel


def compute_cost_matrix(boxes, logits, gt_bbox, gt_class):
    """boxes [bs,nq,4], logits [bs,nq,C], gt_bbox [bs,ng,4], gt_class [bs,ng]
    -> per-batch block-diagonal cost [bs, nq, ng] (== C.split(sizes, -1)[b] of the reference)."""
    bs, nq, _ = boxes.shape
    ng = gt_bbox.shape[1]
    num_classes = logits.shape[-1]

    # Transposed, lane-dense layout: queries padded to 128 lanes; GT boxes to 8 sublanes
    # (+1 extra row reserved at index ng for the softmax denominator); classes to 8 sublanes.
    nq_pad = _round_up(nq, 128)
    tq = nq_pad if nq_pad <= 512 else next(t for t in (512, 384, 256, 128) if nq_pad % t == 0)
    g_pad = _round_up(ng + 1, 8)
    c_pad = _round_up(num_classes, 8)

    # Padded class rows / query lanes get a very negative logit -> exp underflows to 0,
    # so they never perturb the gathered probabilities or the matmul-summed denominator.
    logits_p = jnp.pad(logits, ((0, 0), (0, nq_pad - nq), (0, c_pad - num_classes)),
                       constant_values=-1e9)
    logits_T = jnp.swapaxes(logits_p, 1, 2)                                 # [bs, Cp, NQp]
    boxes_T = jnp.swapaxes(jnp.pad(boxes, ((0, 0), (0, nq_pad - nq), (0, 0))), 1, 2)  # [bs, 4, NQp]
    ids = gt_class.reshape(bs, ng).astype(jnp.int32)
    ids_p = jnp.pad(ids, ((0, 0), (0, g_pad - ng)))[..., None]              # [bs, Gp, 1]
    tbox_p = jnp.pad(gt_bbox, ((0, 0), (0, g_pad - ng), (0, 0)))            # [bs, Gp, 4]

    n_qt = nq_pad // tq
    # Cache the per-batch one-hot across query tiles (valid because q is "arbitrary").
    # Exception: bs == 1 with several query tiles -> keep q "parallel" so a v7x megacore
    # can split the grid, and rebuild the (tiny) one-hot every tile instead.
    cache_onehot = not (bs == 1 and n_qt > 1)
    q_sem = "arbitrary" if cache_onehot else "parallel"

    out = pl.pallas_call(
        _make_cost_kernel(ng, cache_onehot),
        out_shape=jax.ShapeDtypeStruct((bs, g_pad, nq_pad), jnp.float32),
        grid=(bs, n_qt),
        in_specs=[
            pl.BlockSpec((1, c_pad, tq), lambda b, q: (b, 0, q)),   # logits^T tile
            pl.BlockSpec((1, 4, tq), lambda b, q: (b, 0, q)),       # pred boxes^T tile
            pl.BlockSpec((1, g_pad, 1), lambda b, q: (b, 0, 0)),    # tgt class ids (batch b)
            pl.BlockSpec((1, g_pad, 4), lambda b, q: (b, 0, 0)),    # tgt boxes (batch b)
        ],
        out_specs=pl.BlockSpec((1, g_pad, tq), lambda b, q: (b, 0, q)),
        scratch_shapes=[pltpu.VMEM((g_pad, c_pad), jnp.bfloat16)],  # per-batch one-hot cache
        compiler_params=pltpu.CompilerParams(
            dimension_semantics=("parallel", q_sem),
            vmem_limit_bytes=32 * 1024 * 1024,
        ),
    )(logits_T, boxes_T, ids_p, tbox_p)

    # back to the reference orientation [bs, nq, ng]
    return jnp.swapaxes(out[:, :ng, :nq], 1, 2)


def _linear_sum_assignment_bruteforce(cost):
    """Optimal assignment for small matrices (rows >= cols), matching scipy semantics."""
    # TODO(synk): factorial brute force; replace with scipy.optimize.linear_sum_assignment at scale.
    nr, nc = cost.shape
    assert nc <= nr, "expects at least as many queries as GT boxes"
    best_perm, best_cost = None, None
    for perm in itertools.permutations(range(nr), nc):
        c = sum(cost[perm[j], j] for j in range(nc))
        if best_cost is None or c < best_cost:
            best_cost, best_perm = c, perm
    pairs = sorted(zip(best_perm, range(nc)))
    rows = np.array([p[0] for p in pairs], dtype=np.int64)
    cols = np.array([p[1] for p in pairs], dtype=np.int64)
    return rows, cols


def hungarian_matcher(boxes, logits, gt_bbox, gt_class):
    """Forward semantics of HungarianMatcher (use_focal_loss=False, with_mask=False)."""
    bs = boxes.shape[0]
    num_gts = [int(a.shape[0]) for a in gt_class]
    if sum(num_gts) == 0:
        return [(np.array([], dtype=np.int64), np.array([], dtype=np.int64)) for _ in range(bs)]

    # Hot path in Pallas: per-batch block-diagonal cost, so C[b] already holds
    # batch b's own GT columns (C.split(sizes, -1)[b] of the reference).
    C = compute_cost_matrix(boxes, logits, gt_bbox, gt_class)   # [bs, nq, ng]
    C_np = np.asarray(jax.block_until_ready(C))
    sizes = [int(a.shape[0]) for a in gt_bbox]
    # TODO(synk): linear_sum_assignment is a sequential combinatorial solver; kept on host.
    return [_linear_sum_assignment_bruteforce(C_np[b][:, :sizes[b]]) for b in range(bs)]


def _cost_matrix_ref(boxes, logits, gt_bbox, gt_class):
    """Plain-JAX reference (exact torch semantics), reduced to the per-batch blocks."""
    bs, nq, _ = boxes.shape
    ng = gt_bbox.shape[1]
    Q, G = bs * nq, bs * ng
    probs = jax.nn.softmax(logits.reshape(Q, -1).astype(jnp.float32), axis=-1)
    tgt_ids = gt_class.reshape(G)
    out_prob = probs[:, tgt_ids]
    cost_class = -out_prob
    ob = boxes.reshape(Q, 4).astype(jnp.float32)
    tb = gt_bbox.reshape(G, 4).astype(jnp.float32)
    cost_bbox = jnp.abs(ob[:, None, :] - tb[None, :, :]).sum(-1)

    def to_xyxy(b):
        return jnp.concatenate([b[..., :2] - 0.5 * b[..., 2:], b[..., :2] + 0.5 * b[..., 2:]], -1)

    p, g = to_xyxy(ob)[:, None, :], to_xyxy(tb)[None, :, :]
    x1, y1, x2, y2 = (p[..., i] for i in range(4))
    x1g, y1g, x2g, y2g = (g[..., i] for i in range(4))
    w_i = jnp.clip(jnp.minimum(x2, x2g) - jnp.maximum(x1, x1g), 0)
    h_i = jnp.clip(jnp.minimum(y2, y2g) - jnp.maximum(y1, y1g), 0)
    overlap = w_i * h_i
    union = (x2 - x1) * (y2 - y1) + (x2g - x1g) * (y2g - y1g) - overlap + GIOU_EPS
    iou = overlap / union
    area_c = (jnp.maximum(x2, x2g) - jnp.minimum(x1, x1g)) * \
             (jnp.maximum(y2, y2g) - jnp.minimum(y1, y1g)) + GIOU_EPS
    miou = iou - (area_c - union) / area_c
    C = (MATCHER_COEFF["class"] * cost_class + MATCHER_COEFF["bbox"] * cost_bbox
         + MATCHER_COEFF["giou"] * (-miou)).reshape(bs, nq, G)
    # per-batch block diagonal: columns of batch b's own GT boxes
    return jnp.stack([C[b, :, b * ng:(b + 1) * ng] for b in range(bs)], axis=0)


if __name__ == "__main__":
    key = jax.random.PRNGKey(0)
    bs, num_queries, num_classes, num_gt = 2, 8, 8, 3

    k1, k2, k3, k4 = jax.random.split(key, 4)
    boxes = jax.nn.sigmoid(jax.random.normal(k1, (bs, num_queries, 4), jnp.float32))    # cxcywh in (0,1)
    logits = jax.random.normal(k2, (bs, num_queries, num_classes), jnp.float32)
    gt_bbox = jax.nn.sigmoid(jax.random.normal(k3, (bs, num_gt, 4), jnp.float32))
    gt_class = jax.random.randint(k4, (bs, num_gt), 0, num_classes, jnp.int32)

    # Validate the Pallas kernel against a plain-JAX reference.
    # Tolerance is relaxed vs. pure f32: the class cost (numerator and MXU-summed
    # denominator) uses bf16 operands and the softmax/GIoU divides use approx EUP
    # reciprocals; the downstream Hungarian assignment only depends on cost ordering.
    C_kernel = jax.block_until_ready(compute_cost_matrix(boxes, logits, gt_bbox, gt_class))
    C_ref = jax.block_until_ready(_cost_matrix_ref(boxes, logits, gt_bbox, gt_class))
    np.testing.assert_allclose(np.asarray(C_kernel), np.asarray(C_ref), rtol=3e-2, atol=3e-2)
    assert np.isfinite(np.asarray(C_kernel)).all()

    indices = hungarian_matcher(boxes, logits, gt_bbox, gt_class)
    assert len(indices) == bs
    for i, j in indices:
        assert i.dtype == np.int64 and j.dtype == np.int64
        assert len(i) == len(j) == num_gt

    print("KERNEL_OK")
</pallas_src>

<mosaic_0001>
module attributes {stable_mosaic.version = 11 : i64} {
  func.func @kernel(%arg0: i32, %arg1: i32, %arg2: memref<1x8x128xf32, #tpu.memory_space<vmem>>, %arg3: memref<1x4x128xf32, #tpu.memory_space<vmem>>, %arg4: memref<1x8x1xi32, #tpu.memory_space<vmem>>, %arg5: memref<1x8x4xf32, #tpu.memory_space<vmem>>, %arg6: memref<1x8x128xf32, #tpu.memory_space<vmem>>, %arg7: memref<8x8xbf16, #tpu.memory_space<vmem>>) attributes {dimension_semantics = [#tpu.dimension_semantics<parallel>, #tpu.dimension_semantics<arbitrary>], iteration_bounds = array<i64: 2, 1>, scalar_prefetch = 0 : i64, scratch_operands = 1 : i64, tpu.core_type = #tpu.core_type<tc>, window_params = [{transform_indices = @transform_0, window_bounds = array<i64: 1, 8, 128>}, {transform_indices = @transform_1, window_bounds = array<i64: 1, 4, 128>}, {transform_indices = @transform_2, window_bounds = array<i64: 1, 8, 1>}, {transform_indices = @transform_3, window_bounds = array<i64: 1, 8, 4>}, {transform_indices = @transform_4, window_bounds = array<i64: 1, 8, 128>}]} {
    %c0_i32 = arith.constant 0 : i32
    %0 = arith.cmpi eq, %arg1, %c0_i32 : i32
    %1 = arith.extui %0 : i1 to i32
    %c0_i32_0 = arith.constant 0 : i32
    %2 = arith.cmpi ne, %1, %c0_i32_0 : i32
    scf.if %2 {
      %c0_29 = arith.constant 0 : index
      %c0_30 = arith.constant 0 : index
      %c0_31 = arith.constant 0 : index
      %132 = vector.load %arg4[%c0_29, %c0_30, %c0_31] : memref<1x8x1xi32, #tpu.memory_space<vmem>>, vector<1x8x1xi32>
      %133 = vector.shape_cast %132 : vector<1x8x1xi32> to vector<8x1xi32>
      %134 = tpu.iota {dimensions = array<i32: 1>} : vector<8x8xi32>
      %135 = tpu.iota {dimensions = array<i32: 0>} : vector<8x8xi32>
      %136 = vector.broadcast %133 : vector<8x1xi32> to vector<8x8xi32>
      %137 = arith.cmpi eq, %134, %136 : vector<8x8xi32>
      %c3_i32 = arith.constant 3 : i32
      %138 = vector.broadcast %c3_i32 : i32 to vector<8x8xi32>
      %139 = arith.cmpi eq, %135, %138 : vector<8x8xi32>
      %140 = arith.ori %137, %139 : vector<8x8xi1>
      %141 = arith.extui %140 : vector<8x8xi1> to vector<8x8xi32>
      %142 = arith.sitofp %141 : vector<8x8xi32> to vector<8x8xf32>
      %143 = arith.truncf %142 : vector<8x8xf32> to vector<8x8xbf16>
      %c0_32 = arith.constant 0 : index
      %c0_33 = arith.constant 0 : index
      %144 = vector.load %arg7[%c0_32, %c0_33] : memref<8x8xbf16, #tpu.memory_space<vmem>>, vector<8x8xbf16>
      tpu.vector_store %arg7[%c0_32, %c0_33], %143 {strides = array<i32>} : memref<8x8xbf16, #tpu.memory_space<vmem>>, vector<8x8xbf16>,
    } else {
    }
    %c0 = arith.constant 0 : index
    %c0_1 = arith.constant 0 : index
    %c0_2 = arith.constant 0 : index
    %3 = vector.load %arg2[%c0, %c0_1, %c0_2] : memref<1x8x128xf32, #tpu.memory_space<vmem>>, vector<1x8x128xf32>
    %4 = vector.shape_cast %3 : vector<1x8x128xf32> to vector<8x128xf32>
    %cst = arith.constant dense<0xFF800000> : vector<128xf32>
    %5 = vector.multi_reduction <maximumf>, %4, %cst [0] : vector<8x128xf32> to vector<128xf32>
    %6 = vector.shape_cast %5 : vector<128xf32> to vector<1x128xf32>
    %7 = vector.broadcast %6 : vector<1x128xf32> to vector<8x128xf32>
    %8 = arith.subf %4, %7 : vector<8x128xf32>
    %9 = math.exp %8 : vector<8x128xf32>
    %c0_3 = arith.constant 0 : index
    %c0_4 = arith.constant 0 : index
    %10 = vector.load %arg7[%c0_3, %c0_4] : memref<8x8xbf16, #tpu.memory_space<vmem>>, vector<8x8xbf16>
    %11 = arith.truncf %9 : vector<8x128xf32> to vector<8x128xbf16>
    %cst_5 = arith.constant dense<0.000000e+00> : vector<8x128xf32>
    %12 = tpu.matmul %10, %11, %cst_5 {dimension_numbers = #tpu.dot_dimension_numbers<[1], [0], [0], [1], [0, 0, 1, 1], [], []>} : vector<8x8xbf16>, vector<8x128xbf16>, vector<8x128xf32> -> vector<8x128xf32>
    %13 = vector.extract_strided_slice %12 {offsets = [3, 0], sizes = [1, 128], strides = [1, 1]} : vector<8x128xf32> to vector<1x128xf32>
    %cst_6 = arith.constant 1.000000e-30 : f32
    %14 = vector.broadcast %cst_6 : f32 to vector<1x128xf32>
    %15 = arith.maximumf %13, %14 : vector<1x128xf32>
    %16 = tpu.reciprocal %15 {approx = true} : vector<1x128xf32> -> vector<1x128xf32>
    %17 = vector.broadcast %16 : vector<1x128xf32> to vector<8x128xf32>
    %18 = arith.mulf %12, %17 : vector<8x128xf32>
    %cst_7 = arith.constant 0.000000e+00 : f32
    %19 = vector.broadcast %cst_7 : f32 to vector<8x128xf32>
    %20 = arith.subf %19, %18 : vector<8x128xf32>
    %cst_8 = arith.constant 1.000000e+00 : f32
    %21 = vector.broadcast %cst_8 : f32 to vector<8x128xf32>
    %22 = arith.mulf %21, %20 : vector<8x128xf32>
    %c0_9 = arith.constant 0 : index
    %c0_10 = arith.constant 0 : index
    %c0_11 = arith.constant 0 : index
    %23 = vector.load %arg3[%c0_9, %c0_10, %c0_11] : memref<1x4x128xf32, #tpu.memory_space<vmem>>, vector<1x4x128xf32>
    %24 = vector.shape_cast %23 : vector<1x4x128xf32> to vector<4x128xf32>
    %c0_12 = arith.constant 0 : index
    %c0_13 = arith.constant 0 : index
    %c0_14 = arith.constant 0 : index
    %25 = vector.load %arg5[%c0_12, %c0_13, %c0_14] : memref<1x8x4xf32, #tpu.memory_space<vmem>>, vector<1x8x4xf32>
    %26 = vector.shape_cast %25 : vector<1x8x4xf32> to vector<8x4xf32>
    %27 = vector.extract_strided_slice %24 {offsets = [0, 0], sizes = [1, 128], strides = [1, 1]} : vector<4x128xf32> to vector<1x128xf32>
    %28 = vector.extract_strided_slice %24 {offsets = [1, 0], sizes = [1, 128], strides = [1, 1]} : vector<4x128xf32> to vector<1x128xf32>
    %29 = vector.extract_strided_slice %24 {offsets = [2, 0], sizes = [1, 128], strides = [1, 1]} : vector<4x128xf32> to vector<1x128xf32>
    %30 = vector.extract_strided_slice %24 {offsets = [3, 0], sizes = [1, 128], strides = [1, 1]} : vector<4x128xf32> to vector<1x128xf32>
    %31 = vector.extract_strided_slice %26 {offsets = [0, 0], sizes = [8, 1], strides = [1, 1]} : vector<8x4xf32> to vector<8x1xf32>
    %32 = vector.extract_strided_slice %26 {offsets = [0, 1], sizes = [8, 1], strides = [1, 1]} : vector<8x4xf32> to vector<8x1xf32>
    %33 = vector.extract_strided_slice %26 {offsets = [0, 2], sizes = [8, 1], strides = [1, 1]} : vector<8x4xf32> to vector<8x1xf32>
    %34 = vector.extract_strided_slice %26 {offsets = [0, 3], sizes = [8, 1], strides = [1, 1]} : vector<8x4xf32> to vector<8x1xf32>
    %35 = vector.broadcast %31 : vector<8x1xf32> to vector<8x128xf32>
    %36 = vector.broadcast %27 : vector<1x128xf32> to vector<8x128xf32>
    %37 = arith.subf %35, %36 : vector<8x128xf32>
    %38 = math.absf %37 : vector<8x128xf32>
    %39 = vector.broadcast %32 : vector<8x1xf32> to vector<8x128xf32>
    %40 = vector.broadcast %28 : vector<1x128xf32> to vector<8x128xf32>
    %41 = arith.subf %39, %40 : vector<8x128xf32>
    %42 = math.absf %41 : vector<8x128xf32>
    %43 = arith.addf %38, %42 : vector<8x128xf32>
    %44 = vector.broadcast %33 : vector<8x1xf32> to vector<8x128xf32>
    %45 = vector.broadcast %29 : vector<1x128xf32> to vector<8x128xf32>
    %46 = arith.subf %44, %45 : vector<8x128xf32>
    %47 = math.absf %46 : vector<8x128xf32>
    %48 = arith.addf %43, %47 : vector<8x128xf32>
    %49 = vector.broadcast %34 : vector<8x1xf32> to vector<8x128xf32>
    %50 = vector.broadcast %30 : vector<1x128xf32> to vector<8x128xf32>
    %51 = arith.subf %49, %50 : vector<8x128xf32>
    %52 = math.absf %51 : vector<8x128xf32>
    %53 = arith.addf %48, %52 : vector<8x128xf32>
    %cst_15 = arith.constant 5.000000e+00 : f32
    %54 = vector.broadcast %cst_15 : f32 to vector<8x128xf32>
    %55 = arith.mulf %54, %53 : vector<8x128xf32>
    %56 = arith.addf %22, %55 : vector<8x128xf32>
    %cst_16 = arith.constant 5.000000e-01 : f32
    %57 = vector.broadcast %cst_16 : f32 to vector<1x128xf32>
    %58 = arith.mulf %57, %29 : vector<1x128xf32>
    %cst_17 = arith.constant 5.000000e-01 : f32
    %59 = vector.broadcast %cst_17 : f32 to vector<1x128xf32>
    %60 = arith.mulf %59, %30 : vector<1x128xf32>
    %cst_18 = arith.constant 5.000000e-01 : f32
    %61 = vector.broadcast %cst_18 : f32 to vector<8x1xf32>
    %62 = arith.mulf %61, %33 : vector<8x1xf32>
    %cst_19 = arith.constant 5.000000e-01 : f32
    %63 = vector.broadcast %cst_19 : f32 to vector<8x1xf32>
    %64 = arith.mulf %63, %34 : vector<8x1xf32>
    %65 = arith.subf %27, %58 : vector<1x128xf32>
    %66 = arith.addf %27, %58 : vector<1x128xf32>
    %67 = arith.subf %31, %62 : vector<8x1xf32>
    %68 = arith.addf %31, %62 : vector<8x1xf32>
    %69 = vector.broadcast %66 : vector<1x128xf32> to vector<8x128xf32>
    %70 = vector.broadcast %68 : vector<8x1xf32> to vector<8x128xf32>
    %71 = arith.minimumf %69, %70 : vector<8x128xf32>
    %72 = vector.broadcast %65 : vector<1x128xf32> to vector<8x128xf32>
    %73 = vector.broadcast %67 : vector<8x1xf32> to vector<8x128xf32>
    %74 = arith.maximumf %72, %73 : vector<8x128xf32>
    %75 = arith.subf %71, %74 : vector<8x128xf32>
    %cst_20 = arith.constant 0.000000e+00 : f32
    %76 = vector.broadcast %cst_20 : f32 to vector<8x128xf32>
    %77 = arith.maximumf %75, %76 : vector<8x128xf32>
    %78 = vector.broadcast %66 : vector<1x128xf32> to vector<8x128xf32>
    %79 = vector.broadcast %68 : vector<8x1xf32> to vector<8x128xf32>
    %80 = arith.maximumf %78, %79 : vector<8x128xf32>
    %81 = vector.broadcast %65 : vector<1x128xf32> to vector<8x128xf32>
    %82 = vector.broadcast %67 : vector<8x1xf32> to vector<8x128xf32>
    %83 = arith.minimumf %81, %82 : vector<8x128xf32>
    %84 = arith.subf %80, %83 : vector<8x128xf32>
    %85 = arith.subf %28, %60 : vector<1x128xf32>
    %86 = arith.addf %28, %60 : vector<1x128xf32>
    %87 = arith.subf %32, %64 : vector<8x1xf32>
    %88 = arith.addf %32, %64 : vector<8x1xf32>
    %89 = vector.broadcast %86 : vector<1x128xf32> to vector<8x128xf32>
    %90 = vector.broadcast %88 : vector<8x1xf32> to vector<8x128xf32>
    %91 = arith.minimumf %89, %90 : vector<8x128xf32>
    %92 = vector.broadcast %85 : vector<1x128xf32> to vector<8x128xf32>
    %93 = vector.broadcast %87 : vector<8x1xf32> to vector<8x128xf32>
    %94 = arith.maximumf %92, %93 : vector<8x128xf32>
    %95 = arith.subf %91, %94 : vector<8x128xf32>
    %cst_21 = arith.constant 0.000000e+00 : f32
    %96 = vector.broadcast %cst_21 : f32 to vector<8x128xf32>
    %97 = arith.maximumf %95, %96 : vector<8x128xf32>
    %98 = vector.broadcast %86 : vector<1x128xf32> to vector<8x128xf32>
    %99 = vector.broadcast %88 : vector<8x1xf32> to vector<8x128xf32>
    %100 = arith.maximumf %98, %99 : vector<8x128xf32>
    %101 = vector.broadcast %85 : vector<1x128xf32> to vector<8x128xf32>
    %102 = vector.broadcast %87 : vector<8x1xf32> to vector<8x128xf32>
    %103 = arith.minimumf %101, %102 : vector<8x128xf32>
    %104 = arith.subf %100, %103 : vector<8x128xf32>
    %105 = arith.mulf %77, %97 : vector<8x128xf32>
    %106 = arith.mulf %29, %30 : vector<1x128xf32>
    %107 = arith.mulf %33, %34 : vector<8x1xf32>
    %108 = vector.broadcast %106 : vector<1x128xf32> to vector<8x128xf32>
    %109 = vector.broadcast %107 : vector<8x1xf32> to vector<8x128xf32>
    %110 = arith.addf %108, %109 : vector<8x128xf32>
    %111 = arith.subf %110, %105 : vector<8x128xf32>
    %cst_22 = arith.constant 1.000000e-10 : f32
    %112 = vector.broadcast %cst_22 : f32 to vector<8x128xf32>
    %113 = arith.addf %111, %112 : vector<8x128xf32>
    %114 = arith.mulf %84, %104 : vector<8x128xf32>
    %cst_23 = arith.constant 1.000000e-10 : f32
    %115 = vector.broadcast %cst_23 : f32 to vector<8x128xf32>
    %116 = arith.addf %114, %115 : vector<8x128xf32>
    %117 = arith.mulf %113, %116 : vector<8x128xf32>
    %118 = tpu.reciprocal %117 {approx = true} : vector<8x128xf32> -> vector<8x128xf32>
    %119 = arith.mulf %105, %116 : vector<8x128xf32>
    %120 = arith.subf %116, %113 : vector<8x128xf32>
    %121 = arith.mulf %120, %113 : vector<8x128xf32>
    %122 = arith.subf %119, %121 : vector<8x128xf32>
    %123 = arith.mulf %122, %118 : vector<8x128xf32>
    %cst_24 = arith.constant 0.000000e+00 : f32
    %124 = vector.broadcast %cst_24 : f32 to vector<8x128xf32>
    %125 = arith.subf %124, %123 : vector<8x128xf32>
    %cst_25 = arith.constant 2.000000e+00 : f32
    %126 = vector.broadcast %cst_25 : f32 to vector<8x128xf32>
    %127 = arith.mulf %126, %125 : vector<8x128xf32>
    %128 = arith.addf %56, %127 : vector<8x128xf32>
    %c0_26 = arith.constant 0 : index
    %c0_27 = arith.constant 0 : index
    %c0_28 = arith.constant 0 : index
    %129 = vector.load %arg6[%c0_26, %c0_27, %c0_28] : memref<1x8x128xf32, #tpu.memory_space<vmem>>, vector<1x8x128xf32>
    %130 = vector.shape_cast %129 : vector<1x8x128xf32> to vector<8x128xf32>
    %131 = vector.shape_cast %128 : vector<8x128xf32> to vector<1x8x128xf32>
    tpu.vector_store %arg6[%c0_26, %c0_27, %c0_28], %131 {strides = array<i32>} : memref<1x8x128xf32, #tpu.memory_space<vmem>>, vector<1x8x128xf32>,
    return
  }
  func.func @transform_0(%arg0: i32, %arg1: i32) -> (i32, i32, i32) {
    %c0_i32 = arith.constant 0 : i32
    %c0_i32_0 = arith.constant 0 : i32
    return %arg0, %c0_i32, %arg1 : i32, i32, i32
  }
  func.func @transform_1(%arg0: i32, %arg1: i32) -> (i32, i32, i32) {
    %c0_i32 = arith.constant 0 : i32
    %c0_i32_0 = arith.constant 0 : i32
    return %arg0, %c0_i32, %arg1 : i32, i32, i32
  }
  func.func @transform_2(%arg0: i32, %arg1: i32) -> (i32, i32, i32) {
    %c0_i32 = arith.constant 0 : i32
    %c0_i32_0 = arith.constant 0 : i32
    %c0_i32_1 = arith.constant 0 : i32
    return %arg0, %c0_i32, %c0_i32_0 : i32, i32, i32
  }
  func.func @transform_3(%arg0: i32, %arg1: i32) -> (i32, i32, i32) {
    %c0_i32 = arith.constant 0 : i32
    %c0_i32_0 = arith.constant 0 : i32
    %c0_i32_1 = arith.constant 0 : i32
    return %arg0, %c0_i32, %c0_i32_0 : i32, i32, i32
  }
  func.func @transform_4(%arg0: i32, %arg1: i32) -> (i32, i32, i32) {
    %c0_i32 = arith.constant 0 : i32
    %c0_i32_0 = arith.constant 0 : i32
    return %arg0, %c0_i32, %arg1 : i32, i32, i32
  }
}

</mosaic_0001>

<llo_original>
// kernel: tpu_custom_call.1
$region0: #{tpu_custom_call.1}
  #allocation0 [shape = 'u32[]', space=smem, size = 0x4, offset = 0x4, fixed_abs, tag = 'smem constant byte address 0x4 - core index']
  #allocation1 [shape = 'u32[144,128]{1,0:T(1,128)}', space=vmem, size = 0x12000, scoped, tag = 'internal scratch']
  #allocation2 [shape = 'bf16[8,8]{1,0:T(8,128)(2,1)}', space=vmem, size = 0x800, scoped, tag = 'scratch operand']
  %s0 = inlined_call_operand.vmem [shape: f32[2,8,128], index: 0, kind: input, shape index: {}]
  %s1 = inlined_call_operand.vmem [shape: f32[2,4,128], index: 1, kind: input, shape index: {}]
  %s2 = inlined_call_operand.vmem [shape: s32[2,8,1], index: 2, kind: input, shape index: {}]
  %s3 = inlined_call_operand.vmem [shape: f32[2,8,4], index: 3, kind: input, shape index: {}]
  %s4 = inlined_call_operand.hbm [shape: f32[2,8,128], index: 4, kind: output, shape index: {}]
  %s5 = sld [smem:[#allocation0]]
  $region53: #{tpu_custom_call.1} parent=0
    _
  %s7 = ssub.s32 1, %s5
  %s8 = scalar_select 0, %s7, %s5
  $region1: #{tpu_custom_call.1} parent=0
    #allocation3 [shape = 'u8[8192]{0}', space=vmem, size = 0x2000, scoped, tag = 'output window, operand 0']
    #allocation4 [shape = 's32[2]{0}', space=sflag, size = 0x8, scoped, tag = 'scoped memory for tpu_custom_call.1']
    %9 = vsyncpa [#allocation4], 0
    %s10 = scalar_lea.sflag [#allocation4], 1
    %11 = vsyncpa %s10, 0
    loop: start=0, step=1, limit=4
    $region2: #{tpu_custom_call.1} parent=1 // loop_pre_header
      _
    $region3: #{tpu_custom_call.1} parent=1 // loop_header
      %s13 = sphi 0, %s17
      %p14 = scmp.ge.s32.totalorder %s13, 4
      %s20 = sphi 0, %s32
      %s21 = sphi 0, %s28
      %s22 = sphi 0, %s20
      %s23 = sphi 0, %s21
      %s24 = sphi 0, %s22
      %s25 = sphi 0, %s23
      %s37 = sphi 0, %s39
      %s40 = sphi 0, %s37
      %s41 = sphi 0, %s40
      %s57 = sphi 0, %s41
      %s65 = sphi 0, %s67
      %s68 = sphi 0, %s65
      %s69 = sphi 0, %s68
      %s85 = sphi 0, %s69
      %s91 = sphi 0, %s93
      %s94 = sphi 0, %s91
      %s95 = sphi 0, %s94
      %s111 = sphi 0, %s95
      %s117 = sphi 0, %s119
      %s120 = sphi 0, %s117
      %s121 = sphi 0, %s120
      %s137 = sphi 0, %s121
      %s145 = sphi 0, %s147
      %s148 = sphi 0, %s145
      %s149 = sphi 0, %s148
      %s165 = sphi 0, %s149
    $region4: #{tpu_custom_call.1} parent=1 // loop_header_branch
      %16 = sbr.rel (%p14) target = $region8
    $region5: #{tpu_custom_call.1} parent=1 // loop_body
      %s18 = ssub.s32 %s13, 1
      %s19 = ssub.s32 %s13, 2
      %s26 = sadd.s32 1, %s21
      %p27 = scmp.ge.s32.totalorder %s26, 1
      %s28 = scalar_select %p27, 0, %s26
      %s29 = sadd.s32 1, %s20
      %s30 = scalar_select %p27, %s29, %s20
      %p31 = scmp.ge.s32.totalorder %s30, 2
      %s32 = scalar_select %p31, 0, %s30
      %s33 = ssub.s32 %s20, %s32
      %s34 = ssub.s32 %s21, %s28
      %s35 = sor.u32 %s33, %s34
      %p36 = scmp.eq.s32.totalorder %s35, 0
      %s38 = sadd.s32 %s37, 1
      %s39 = scalar_select %p36, %s37, %s38
      %p42 = pneg %p36
      %p43 = scmp.eq.s32.totalorder %s13, 1
      %p44 = por %p42, %p43
      %p45 = scmp.ne.s32.totalorder %s37, %s40
      %p46 = scmp.eq.s32.totalorder %s13, 0
      %p47 = por %p45, %p46
      %p48 = scmp.ne.s32.totalorder %s37, %s40
      %p49 = scmp.eq.s32.totalorder %s18, 1
      %p50 = por %p48, %p49
      %p51 = scmp.ne.s32.totalorder %s40, %s41
      %p52 = scmp.eq.s32.totalorder %s18, 0
      %p53 = por %p51, %p52
      %p54 = scmp.ne.s32.totalorder %s40, %s41
      %p55 = scmp.eq.s32.totalorder %s19, 1
      %p56 = por %p54, %p55
      %p58 = scmp.ne.s32.totalorder %s41, %s57
      %p59 = scmp.eq.s32.totalorder %s19, 0
      %p60 = por %p58, %p59
      %s61 = ssub.s32 %s20, %s32
      %s62 = ssub.s32 %s21, %s28
      %s63 = sor.u32 %s61, %s62
      %p64 = scmp.eq.s32.totalorder %s63, 0
      %s66 = sadd.s32 %s65, 1
      %s67 = scalar_select %p64, %s65, %s66
      %p70 = pneg %p64
      %p71 = scmp.eq.s32.totalorder %s13, 1
      %p72 = por %p70, %p71
      %p73 = scmp.ne.s32.totalorder %s65, %s68
      %p74 = scmp.eq.s32.totalorder %s13, 0
      %p75 = por %p73, %p74
      %p76 = scmp.ne.s32.totalorder %s65, %s68
      %p77 = scmp.eq.s32.totalorder %s18, 1
      %p78 = por %p76, %p77
      %p79 = scmp.ne.s32.totalorder %s68, %s69
      %p80 = scmp.eq.s32.totalorder %s18, 0
      %p81 = por %p79, %p80
      %p82 = scmp.ne.s32.totalorder %s68, %s69
      %p83 = scmp.eq.s32.totalorder %s19, 1
      %p84 = por %p82, %p83
      %p86 = scmp.ne.s32.totalorder %s69, %s85
      %p87 = scmp.eq.s32.totalorder %s19, 0
      %p88 = por %p86, %p87
      %s89 = ssub.s32 %s20, %s32
      %p90 = scmp.eq.s32.totalorder %s89, 0
      %s92 = sadd.s32 %s91, 1
      %s93 = scalar_select %p90, %s91, %s92
      %p96 = pneg %p90
      %p97 = scmp.eq.s32.totalorder %s13, 1
      %p98 = por %p96, %p97
      %p99 = scmp.ne.s32.totalorder %s91, %s94
      %p100 = scmp.eq.s32.totalorder %s13, 0
      %p101 = por %p99, %p100
      %p102 = scmp.ne.s32.totalorder %s91, %s94
      %p103 = scmp.eq.s32.totalorder %s18, 1
      %p104 = por %p102, %p103
      %p105 = scmp.ne.s32.totalorder %s94, %s95
      %p106 = scmp.eq.s32.totalorder %s18, 0
      %p107 = por %p105, %p106
      %p108 = scmp.ne.s32.totalorder %s94, %s95
      %p109 = scmp.eq.s32.totalorder %s19, 1
      %p110 = por %p108, %p109
      %p112 = scmp.ne.s32.totalorder %s95, %s111
      %p113 = scmp.eq.s32.totalorder %s19, 0
      %p114 = por %p112, %p113
      %s115 = ssub.s32 %s20, %s32
      %p116 = scmp.eq.s32.totalorder %s115, 0
      %s118 = sadd.s32 %s117, 1
      %s119 = scalar_select %p116, %s117, %s118
      %p122 = pneg %p116
      %p123 = scmp.eq.s32.totalorder %s13, 1
      %p124 = por %p122, %p123
      %p125 = scmp.ne.s32.totalorder %s117, %s120
      %p126 = scmp.eq.s32.totalorder %s13, 0
      %p127 = por %p125, %p126
      %p128 = scmp.ne.s32.totalorder %s117, %s120
      %p129 = scmp.eq.s32.totalorder %s18, 1
      %p130 = por %p128, %p129
      %p131 = scmp.ne.s32.totalorder %s120, %s121
      %p132 = scmp.eq.s32.totalorder %s18, 0
      %p133 = por %p131, %p132
      %p134 = scmp.ne.s32.totalorder %s120, %s121
      %p135 = scmp.eq.s32.totalorder %s19, 1
      %p136 = por %p134, %p135
      %p138 = scmp.ne.s32.totalorder %s121, %s137
      %p139 = scmp.eq.s32.totalorder %s19, 0
      %p140 = por %p138, %p139
      %s141 = ssub.s32 %s20, %s32
      %s142 = ssub.s32 %s21, %s28
      %s143 = sor.u32 %s141, %s142
      %p144 = scmp.eq.s32.totalorder %s143, 0
      %s146 = sadd.s32 %s145, 1
      %s147 = scalar_select %p144, %s145, %s146
      %p150 = pneg %p144
      %p151 = scmp.eq.s32.totalorder %s13, 1
      %p152 = por %p150, %p151
      %p153 = scmp.ne.s32.totalorder %s145, %s148
      %p154 = scmp.eq.s32.totalorder %s13, 0
      %p155 = por %p153, %p154
      %p156 = scmp.ne.s32.totalorder %s145, %s148
      %p157 = scmp.eq.s32.totalorder %s18, 1
      %p158 = por %p156, %p157
      %p159 = scmp.ne.s32.totalorder %s148, %s149
      %p160 = scmp.eq.s32.totalorder %s18, 0
      %p161 = por %p159, %p160
      %p162 = scmp.ne.s32.totalorder %s148, %s149
      %p163 = scmp.eq.s32.totalorder %s19, 1
      %p164 = por %p162, %p163
      %p166 = scmp.ne.s32.totalorder %s149, %s165
      %p167 = scmp.eq.s32.totalorder %s19, 0
      %p168 = por %p166, %p167
      %p169 = scmp.le.s32.totalorder 1, %s13
      %p170 = scmp.lt.s32.totalorder %s13, 3
      %p171 = pnand %p169, %p170
      %p172 = pneg %p171
      // Predicated region
      $region9: #{tpu_custom_call.1} parent=5 // pred_check
        _
      $region10: #{tpu_custom_call.1} parent=5 // pred_check_branch
        %174 = sbr.rel (%p171) target = $region12
      $region11: #{tpu_custom_call.1} parent=5 // pred_region
        %s175 = ssub.s32 %s13, 1
      $region12: #{tpu_custom_call.1} parent=5 // pred_fallthru
        _
      %p176 = scmp.lt.s32.totalorder %s13, 2
      // Predicated region
      $region13: #{tpu_custom_call.1} parent=5 // pred_check
        %p177 = pneg %p176
      $region14: #{tpu_custom_call.1} parent=5 // pred_check_branch
        %179 = sbr.rel (%p177) target = $region16
      $region15: #{tpu_custom_call.1} parent=5 // pred_region
        // Predicated region
        $region17: #{tpu_custom_call.1} parent=15 // pred_check
          %p180 = pneg %p47
        $region18: #{tpu_custom_call.1} parent=15 // pred_check_branch
          %182 = sbr.rel (%p180) target = $region20
        $region19: #{tpu_custom_call.1} parent=15 // pred_region
          %p183 = scmp.lt.s32.totalorder %s20, 1
          %s184 = scalar_select %p183, %s20, 1
          %p185 = scmp.lt.s32.totalorder %s21, 0
          %s186 = scalar_select %p185, %s21, 0
          %s187 = sadd.s32 %s186, %s184
          %s188 = smul.addr %s187, 8
          %s189 = scalar_lea.vmem %s0, %s188
        $region20: #{tpu_custom_call.1} parent=15 // pred_fallthru
          _
        // Predicated region
        $region21: #{tpu_custom_call.1} parent=15 // pred_check
          %p190 = pneg %p75
        $region22: #{tpu_custom_call.1} parent=15 // pred_check_branch
          %192 = sbr.rel (%p190) target = $region24
        $region23: #{tpu_custom_call.1} parent=15 // pred_region
          %p193 = scmp.lt.s32.totalorder %s20, 1
          %s194 = scalar_select %p193, %s20, 1
          %p195 = scmp.lt.s32.totalorder %s21, 0
          %s196 = scalar_select %p195, %s21, 0
          %s197 = sadd.s32 %s196, %s194
          %s198 = smul.addr %s197, 4
          %s199 = scalar_lea.vmem %s1, %s198
        $region24: #{tpu_custom_call.1} parent=15 // pred_fallthru
          _
        // Predicated region
        $region25: #{tpu_custom_call.1} parent=15 // pred_check
          %p200 = pneg %p101
        $region26: #{tpu_custom_call.1} parent=15 // pred_check_branch
          %202 = sbr.rel (%p200) target = $region28
        $region27: #{tpu_custom_call.1} parent=15 // pred_region
          %p203 = scmp.lt.s32.totalorder %s20, 1
          %s204 = scalar_select %p203, %s20, 1
          %s205 = smul.addr %s204, 8
          %s206 = scalar_lea.vmem %s2, %s205
        $region28: #{tpu_custom_call.1} parent=15 // pred_fallthru
          _
        // Predicated region
        $region29: #{tpu_custom_call.1} parent=15 // pred_check
          %p207 = pneg %p127
        $region30: #{tpu_custom_call.1} parent=15 // pred_check_branch
          %209 = sbr.rel (%p207) target = $region32
        $region31: #{tpu_custom_call.1} parent=15 // pred_region
          %p210 = scmp.lt.s32.totalorder %s20, 1
          %s211 = scalar_select %p210, %s20, 1
          %s212 = smul.addr %s211, 8
          %s213 = scalar_lea.vmem %s3, %s212
        $region32: #{tpu_custom_call.1} parent=15 // pred_fallthru
          _
      $region16: #{tpu_custom_call.1} parent=5 // pred_fallthru
        _
      %p214 = scmp.le.s32.totalorder 1, %s13
      %p215 = scmp.lt.s32.totalorder %s13, 3
      %p216 = pnand %p214, %p215
      %p217 = pneg %p216
      // Predicated region
      $region33: #{tpu_custom_call.1} parent=5 // pred_check
        _
      $region34: #{tpu_custom_call.1} parent=5 // pred_check_branch
        %219 = sbr.rel (%p216) target = $region36
      $region35: #{tpu_custom_call.1} parent=5 // pred_region
        %s220 = ssub.s32 %s13, 1
        %p221 = scmp.lt.s32.totalorder %s22, 1
        %s222 = scalar_select %p221, %s22, 1
        %p223 = scmp.lt.s32.totalorder %s23, 0
        %s224 = scalar_select %p223, %s23, 0
        %s225 = sadd.s32 %s224, %s222
        %s226 = smul.addr %s225, 8
        %s227 = scalar_lea.vmem %s0, %s226
        %p228 = pneg %p53
        %p229 = pneg %p50
        %p230 = scmp.lt.s32.totalorder %s22, 1
        %s231 = scalar_select %p230, %s22, 1
        %p232 = scmp.lt.s32.totalorder %s23, 0
        %s233 = scalar_select %p232, %s23, 0
        %s234 = sadd.s32 %s233, %s231
        %s235 = smul.addr %s234, 4
        %s236 = scalar_lea.vmem %s1, %s235
        %p237 = pneg %p81
        %p238 = pneg %p78
        %p239 = scmp.lt.s32.totalorder %s22, 1
        %s240 = scalar_select %p239, %s22, 1
        %s241 = smul.addr %s240, 8
        %s242 = scalar_lea.vmem %s2, %s241
        %p243 = pneg %p107
        %p244 = pneg %p104
        %p245 = scmp.lt.s32.totalorder %s22, 1
        %s246 = scalar_select %p245, %s22, 1
        %s247 = smul.addr %s246, 8
        %s248 = scalar_lea.vmem %s3, %s247
        %p249 = pneg %p133
        %p250 = pneg %p130
        %p251 = pneg %p161
        %p252 = pneg %p158
        %s253 = sand.u32 %s148, 1
        %s254 = scalar_lea.sflag [#allocation4], %s253
        %s255 = sand.u32 %s148, 1
        %s256 = smul.addr %s255, 8
        %s257 = scalar_lea.vmem [#allocation3], %s256
        %p258 = scmp.lt.s32.totalorder %s22, 1
        %s259 = scalar_select %p258, %s22, 1
        %p260 = scmp.lt.s32.totalorder %s23, 0
        %s261 = scalar_select %p260, %s23, 0
        %s262 = sadd.s32 %s261, %s259
        %s263 = smul.addr %s262, 8
        %s264 = scalar_lea.vmem %s0, %s263
        %p265 = scmp.lt.s32.totalorder %s22, 1
        %s266 = scalar_select %p265, %s22, 1
        %p267 = scmp.lt.s32.totalorder %s23, 0
        %s268 = scalar_select %p267, %s23, 0
        %s269 = sadd.s32 %s268, %s266
        %s270 = smul.addr %s269, 4
        %s271 = scalar_lea.vmem %s1, %s270
        %p272 = scmp.lt.s32.totalorder %s22, 1
        %s273 = scalar_select %p272, %s22, 1
        %s274 = smul.addr %s273, 8
        %s275 = scalar_lea.vmem %s2, %s274
        %p276 = scmp.lt.s32.totalorder %s22, 1
        %s277 = scalar_select %p276, %s22, 1
        %s278 = smul.addr %s277, 8
        %s279 = scalar_lea.vmem %s3, %s278
        %p281 = scmp.eq.s32.totalorder %s23, 0
        // Predicated region
        $region37: #{tpu_custom_call.1} parent=35 // pred_check
          %p282 = pneg %p281
        $region38: #{tpu_custom_call.1} parent=35 // pred_check_branch
          %284 = sbr.rel (%p282) target = $region40
        $region39: #{tpu_custom_call.1} parent=35 // pred_region
          %v285 = vld [vmem:[%s275] sm:$0xff]
          %v286 = vlaneseq
          %v287 = vand.u32 %v286, 127
          %v288 = vlaneseq
          %v289 = vshrl.u32 %v288, 7
          %290 = vset.pattern.permute.xlu0 0
          %291 = vperm.xlu0 %290, %v285
          %v292 = vpop.permute.xlu0 %291
          %vm293 = vcmp.eq.s32.totalorder %v287, %v292
          %vm294 = vcmp.eq.s32.totalorder %v289, 3
          %vm295 = vmor %vm293, %vm294
          %v296 = vsel %vm295, 1, 0
          %v297 = vcvt.s32.f32 %v296
          %v298 = vpack.c.bf16 %v297, %v297
          %vm299 = vcmask 60416
          %300 = vst.msk [vmem:[#allocation2] sm:$0xf] %vm299, %v298
        $region40: #{tpu_custom_call.1} parent=35 // pred_fallthru
          _
        %v301 = vld [vmem:[%s264] sm:$0xff]
        %v302 = vrot.slane %v301, 4
        %v303 = vmax.f32 %v301, %v302
        %v304 = vrot.slane %v303, 2
        %v305 = vmax.f32 %v303, %v304
        %v306 = vrot.slane %v305, 1
        %v307 = vmax.f32 %v305, %v306
        %v308 = vsub.f32 %v301, %v307
        %v309 = vmul.f32 %v308, 1.442695
        %v310 = vpow.pop %v309
        %v311 = vld [vmem:[#allocation2] sm:$0xf]
        %v312 = vpack.c.bf16 %v310, %v310
        %vm313 = vcmask 64512
        %v315 = vsel %vm313, %v311, 0
        %vm317 = vcmask 1043456
        %v319 = vsel %vm317, %v312, 0
        %321 = vmatprep.subr.bf16.mxu0 0
        %322 = vmatpush1.bf16.msra.mxu0 %v319
        %323 = vmatprep.subr.bf16.mxu0 0
        %324 = vmatpush1.bf16.msra.mxu0 0
        %325 = vmatprep.subr.bf16.mxu0 0
        %326 = vmatpush1.bf16.msra.mxu0 0
        %327 = vmatprep.subr.bf16.mxu0 0
        %328 = vmatpush1.bf16.msra.mxu0 0
        %329 = vmatprep.subr.bf16.mxu0 0
        %330 = vmatpush1.bf16.msra.mxu0 0
        %331 = vmatprep.subr.bf16.mxu0 0
        %332 = vmatpush1.bf16.msra.mxu0 0
        %333 = vmatprep.subr.bf16.mxu0 0
        %334 = vmatpush1.bf16.msra.mxu0 0
        %335 = vmatprep.subr.bf16.mxu0 0
        %336 = vmatpush1.bf16.msra.mxu0 0
        %337 = vmatprep.subr.bf16.mxu0 0
        %338 = vmatpush1.bf16.msra.mxu0 0
        %339 = vmatprep.subr.bf16.mxu0 0
        %340 = vmatpush1.bf16.msra.mxu0 0
        %341 = vmatprep.subr.bf16.mxu0 0
        %342 = vmatpush1.bf16.msra.mxu0 0
        %343 = vmatprep.subr.bf16.mxu0 0
        %344 = vmatpush1.bf16.msra.mxu0 0
        %345 = vmatprep.subr.bf16.mxu0 0
        %346 = vmatpush1.bf16.msra.mxu0 0
        %347 = vmatprep.subr.bf16.mxu0 0
        %348 = vmatpush1.bf16.msra.mxu0 0
        %349 = vmatprep.subr.bf16.mxu0 0
        %350 = vmatpush1.bf16.msra.mxu0 0
        %351 = vmatprep.subr.bf16.mxu0 0
        %352 = vmatpush1.bf16.msra.mxu0 0
        %353 = vmatprep.mubr.bf16.mxu0 0
        %354 = vmatmul.mubr.bf16.gmra.mrb[0].mxu0 %v315
        %v355 = vpop.f32.mrb[0].mxu0
        %v356 = vadd.f32 0.0, %v355
        %v357 = vpop.f32.mrb[0].mxu0
        %v358 = vpop.f32.mrb[0].mxu0
        %v359 = vpop.f32.mrb[0].mxu0
        %360 = vdwg.mxu0
        %v361 = vmax.f32 %v356, 1e-30
        %v362 = vrcp.pop %v361
        %v363 = vlaneseq
        %v364 = vshrl.u32 %v363, 7
        %v365 = vsub.s32 3, %v364
        %v366 = vrot.slane %v362, %v365
        %v367 = vmul.f32 %v356, %v366
        %v368 = vsub.f32 0.0, %v367
        %v369 = vld [vmem:[%s271] sm:$0xf]
        %v370 = vld [vmem:[%s279] sm:$0xff]
        %372 = vset.pattern.permute.xlu0 0
        %373 = vperm.xlu0 %372, %v370
        %v374 = vpop.permute.xlu0 %373
        %v376 = vlaneseq
        %v377 = vshrl.u32 %v376, 7
        %v378 = vsub.s32 0, %v377
        %v379 = vrot.slane %v369, %v378
        %v380 = vsub.f32 %v374, %v379
        %v381 = vand.u32 2147483647, %v380
        %382 = vset.pattern.permute.xlu0 1
        %383 = vperm.xlu0 %382, %v370
        %v384 = vpop.permute.xlu0 %383
        %v386 = vlaneseq
        %v387 = vshrl.u32 %v386, 7
        %v388 = vsub.s32 1, %v387
        %v389 = vrot.slane %v369, %v388
        %v390 = vsub.f32 %v384, %v389
        %v391 = vand.u32 2147483647, %v390
        %v392 = vadd.f32 %v381, %v391
        %393 = vset.pattern.permute.xlu0 2
        %394 = vperm.xlu0 %393, %v370
        %v395 = vpop.permute.xlu0 %394
        %v397 = vlaneseq
        %v398 = vshrl.u32 %v397, 7
        %v399 = vsub.s32 2, %v398
        %v400 = vrot.slane %v369, %v399
        %v401 = vsub.f32 %v395, %v400
        %v402 = vand.u32 2147483647, %v401
        %v403 = vadd.f32 %v392, %v402
        %404 = vset.pattern.permute.xlu0 3
        %405 = vperm.xlu0 %404, %v370
        %v406 = vpop.permute.xlu0 %405
        %v408 = vlaneseq
        %v409 = vshrl.u32 %v408, 7
        %v410 = vsub.s32 3, %v409
        %v411 = vrot.slane %v369, %v410
        %v412 = vsub.f32 %v406, %v411
        %v413 = vand.u32 2147483647, %v412
        %v414 = vadd.f32 %v403, %v413
        %v415 = vmul.f32 %v414, 5.0
        %v416 = vadd.f32 %v368, %v415
        %v417 = vmul.f32 %v369, 0.5
        %v418 = vmul.f32 %v370, 0.5
        %v420 = vrot.slane %v417, 2
        %v422 = vsub.f32 %v369, %v420
        %v423 = vadd.f32 %v369, %v420
        %425 = vrot.lane.b32.xlu0 %v418, 126
        %v426 = vpop.permute.xlu0 %425
        %v428 = vsub.f32 %v370, %v426
        %v429 = vadd.f32 %v370, %v426
        %v430 = vlaneseq
        %v431 = vshrl.u32 %v430, 7
        %v432 = vsub.s32 0, %v431
        %v433 = vrot.slane %v423, %v432
        %435 = vset.pattern.permute.xlu0 0
        %436 = vperm.xlu0 %435, %v429
        %v437 = vpop.permute.xlu0 %436
        %v439 = vmin.f32 %v433, %v437
        %v440 = vlaneseq
        %v441 = vshrl.u32 %v440, 7
        %v442 = vsub.s32 0, %v441
        %v443 = vrot.slane %v422, %v442
        %445 = vset.pattern.permute.xlu0 0
        %446 = vperm.xlu0 %445, %v428
        %v447 = vpop.permute.xlu0 %446
        %v449 = vmax.f32 %v443, %v447
        %v450 = vsub.f32 %v439, %v449
        %v451 = vmax.f32 %v450, 0.0
        %v452 = vmax.f32 %v433, %v437
        %v453 = vmin.f32 %v443, %v447
        %v454 = vsub.f32 %v452, %v453
        %v455 = vlaneseq
        %v456 = vshrl.u32 %v455, 7
        %v457 = vsub.s32 1, %v456
        %v458 = vrot.slane %v423, %v457
        %459 = vset.pattern.permute.xlu0 1
        %460 = vperm.xlu0 %459, %v429
        %v461 = vpop.permute.xlu0 %460
        %v463 = vmin.f32 %v458, %v461
        %v464 = vlaneseq
        %v465 = vshrl.u32 %v464, 7
        %v466 = vsub.s32 1, %v465
        %v467 = vrot.slane %v422, %v466
        %468 = vset.pattern.permute.xlu0 1
        %469 = vperm.xlu0 %468, %v428
        %v470 = vpop.permute.xlu0 %469
        %v472 = vmax.f32 %v467, %v470
        %v473 = vsub.f32 %v463, %v472
        %v474 = vmax.f32 %v473, 0.0
        %v475 = vmax.f32 %v458, %v461
        %v476 = vmin.f32 %v467, %v470
        %v477 = vsub.f32 %v475, %v476
        %v478 = vmul.f32 %v451, %v474
        %v480 = vrot.slane %v369, 1
        %v482 = vmul.f32 %v369, %v480
        %483 = vrot.lane.b32.xlu0 %v370, 127
        %v484 = vpop.permute.xlu0 %483
        %v486 = vmul.f32 %v370, %v484
        %v487 = vlaneseq
        %v488 = vshrl.u32 %v487, 7
        %v489 = vsub.s32 2, %v488
        %v490 = vrot.slane %v482, %v489
        %492 = vset.pattern.permute.xlu0 2
        %493 = vperm.xlu0 %492, %v486
        %v494 = vpop.permute.xlu0 %493
        %v496 = vadd.f32 %v490, %v494
        %v497 = vsub.f32 %v496, %v478
        %v498 = vadd.f32 %v497, 1e-10
        %v499 = vmul.f32 %v454, %v477
        %v500 = vadd.f32 %v499, 1e-10
        %v501 = vmul.f32 %v498, %v500
        %v502 = vrcp.pop %v501
        %v503 = vmul.f32 %v478, %v500
        %v504 = vsub.f32 %v500, %v498
        %v505 = vmul.f32 %v504, %v498
        %v506 = vsub.f32 %v503, %v505
        %v507 = vmul.f32 %v506, %v502
        %v508 = vsub.f32 0.0, %v507
        %v509 = vmul.f32 %v508, 2.0
        %v510 = vadd.f32 %v416, %v509
        %511 = vst [vmem:[%s257] sm:$0xff] %v510
        %s512 = sand.u32 %s148, 1
        %s513 = scalar_lea.sflag [#allocation4], %s512
        %s514 = sand.u32 %s148, 1
        %s515 = smul.addr %s514, 8
        %s516 = scalar_lea.vmem [#allocation3], %s515
        // Predicated region
        $region41: #{tpu_custom_call.1} parent=35 // pred_check
          %p517 = pneg %p158
        $region42: #{tpu_custom_call.1} parent=35 // pred_check_branch
          %519 = sbr.rel (%p517) target = $region44
        $region43: #{tpu_custom_call.1} parent=35 // pred_region
          %s521 = ssub.s32 128, 128
          %522 = vsyncadd %s513, %s521
          %s523 = sadd.s32 %s23, %s22
          %s524 = smul.addr %s523, 128
          %s525 = scalar_lea.hbm %s4, %s524
          %s527 = sshll.u32 %s516, 4
          %s528 = int_to_ptr.vmem [resolvable:$true] %s527
          %530 = dma.vmem_to_hbm [thread:$0]  %s528, 128, %s525, %s513
        $region44: #{tpu_custom_call.1} parent=35 // pred_fallthru
          _
      $region36: #{tpu_custom_call.1} parent=5 // pred_fallthru
        _
      %p531 = scmp.le.s32.totalorder 2, %s13
      // Predicated region
      $region45: #{tpu_custom_call.1} parent=5 // pred_check
        %p532 = pneg %p531
      $region46: #{tpu_custom_call.1} parent=5 // pred_check_branch
        %534 = sbr.rel (%p532) target = $region48
      $region47: #{tpu_custom_call.1} parent=5 // pred_region
        %s535 = ssub.s32 %s13, 2
        // Predicated region
        $region49: #{tpu_custom_call.1} parent=47 // pred_check
          %p536 = pneg %p164
        $region50: #{tpu_custom_call.1} parent=47 // pred_check_branch
          %538 = sbr.rel (%p536) target = $region52
        $region51: #{tpu_custom_call.1} parent=47 // pred_region
          %s539 = sand.u32 %s149, 1
          %s540 = scalar_lea.sflag [#allocation4], %s539
          %s541 = sand.u32 %s149, 1
          %s542 = smul.addr %s541, 8
          %s543 = scalar_lea.vmem [#allocation3], %s542
          %544 = dma.done %s540, 128
        $region52: #{tpu_custom_call.1} parent=47 // pred_fallthru
          _
      $region48: #{tpu_custom_call.1} parent=5 // pred_fallthru
        _
    $region6: #{tpu_custom_call.1} parent=1 // loop_footer
      %s17 = sadd.s32 1, %s13
    $region7: #{tpu_custom_call.1} parent=1 // loop_footer_branch
      %12 = sbr.rel target = $region3
    $region8: #{tpu_custom_call.1} parent=1 // loop_exit
      _
    %545 = vsyncpa [#allocation4], 1
    %s546 = scalar_lea.sflag [#allocation4], 1
    %547 = vsyncpa %s546, 1

</llo_original>
